<compile_context>
chip_gen: v7x
topology: tpu7x:2x2x1
jax: 0.10.0
libtpu: 0.0.40
codegen_flags: <defaults>
</compile_context>

<pallas_src>
import jax
import jax.numpy as jnp
from jax.experimental import pallas as pl
from jax.experimental.pallas import tpu as pltpu


def transfer_model_kernel(p_ref, wcf_ref, pool_ref, wb_ref, bb_ref, wk_ref,
                          bk_ref, out_ref):
    """One batch block (BB images) per grid step; everything resident in VMEM.

    p_ref    : (BB*HW, 9C+1)   bf16  im2col patches (+ ones column)
    wcf_ref  : (9C+1, Fp)      bf16  folded conv weight (+ conv-bias row)
    pool_ref : (BB, BB*HW)     bf16  block-diagonal 1/HW matrix (GAP on MXU)
    wb_ref   : (Fp, BWp)       bf16  bottleneck Linear weight (zero-padded)
    bb_ref   : (1, BWp)        f32   bottleneck bias (zero-padded)
    wk_ref   : (BWp, NCp)      bf16  classifier Linear weight (zero-padded)
    bk_ref   : (1, NCp)        f32   classifier bias (zero-padded)
    out_ref  : (BB, NCp)       f32   padded logits for this batch block
    """
    # ---- surrogate backbone: fused 3x3 conv (+bias) as one matmul, then ReLU ----
    # TODO(synk): the real ResNet-152 backbone has no compact Pallas equivalent;
    # it is replaced by a single conv + GAP surrogate producing output_num() feats.
    acc = jnp.dot(p_ref[...], wcf_ref[...],
                  preferred_element_type=jnp.float32)          # (BB*HW, Fp) f32
    acc = jnp.maximum(acc, 0.0)

    # ---- global average pool on the MXU: block-diag (BB, BB*HW) @ (BB*HW, Fp) ----
    feats = jnp.dot(pool_ref[...], acc.astype(jnp.bfloat16),
                    preferred_element_type=jnp.float32)        # (BB, Fp)

    # ---- bottleneck_layer: Linear + ReLU (bias/ReLU in f32) ----
    h = jnp.dot(feats.astype(jnp.bfloat16), wb_ref[...],
                preferred_element_type=jnp.float32) + bb_ref[...]
    h = jnp.maximum(h, 0.0)                                    # (BB, BWp)

    # ---- classifier_layer: Linear ----
    out_ref[...] = (jnp.dot(h.astype(jnp.bfloat16), wk_ref[...],
                            preferred_element_type=jnp.float32)
                    + bk_ref[...])                             # (BB, NCp)


def _round_up(n, m=128):
    return ((n + m - 1) // m) * m


def transfer_model(x_nchw, params, *, block_b=None):
    """Wrapper: layout plumbing (im2col, weight fold, lane padding) + pallas_call."""
    wc, bc, wb, bb, wk, bk = params
    B, C, H, W = x_nchw.shape
    F = wc.shape[-1]
    BW = wb.shape[-1]
    NC = wk.shape[-1]
    HW = H * W
    K = 9 * C + 1                                   # 9 taps * C channels + bias col
    Fp, BWp, NCp = _round_up(F), _round_up(BW), _round_up(NC)

    # Batch block per grid step.
    if block_b is None:
        block_b = B if B <= 8 else 8
    if B % block_b != 0:
        block_b = B
    n_blk = B // block_b

    # NCHW -> NHWC, zero-pad H/W by 1 for the 3x3 conv.
    x = jnp.transpose(x_nchw, (0, 2, 3, 1)).astype(jnp.float32)
    xp = jnp.pad(x, ((0, 0), (1, 1), (1, 1), (0, 0)))

    # im2col in the wrapper (HBM side): (B*HW, 9C) + ones column -> bf16.
    taps = [xp[:, dh:dh + H, dw:dw + W, :] for dh in range(3) for dw in range(3)]
    patches = jnp.concatenate(taps, axis=-1).reshape(B, HW, 9 * C)
    patches = jnp.concatenate(
        [patches, jnp.ones((B, HW, 1), jnp.float32)], axis=-1)
    patches = patches.reshape(B * HW, K).astype(jnp.bfloat16)       # (B*HW, K)

    # Fold conv weight + bias: (3,3,C,F) -> (9C, F); append bias row; pad F -> Fp.
    wcf = jnp.concatenate([wc.reshape(9 * C, F), bc.reshape(1, F)], axis=0)
    wcf = jnp.pad(wcf, ((0, 0), (0, Fp - F))).astype(jnp.bfloat16)  # (K, Fp)

    # GAP as an MXU dot with a constant block-diagonal 1/HW matrix.
    eye = jnp.eye(block_b, dtype=jnp.float32)
    pool = (jnp.repeat(eye, HW, axis=1) * (1.0 / HW)).astype(jnp.bfloat16)

    # Lane-dense (zero-padded) Linear weights/biases; weights bf16, biases f32.
    wbp = jnp.pad(wb, ((0, Fp - F), (0, BWp - BW))).astype(jnp.bfloat16)
    bbp = jnp.pad(bb.reshape(1, BW), ((0, 0), (0, BWp - BW))).astype(jnp.float32)
    wkp = jnp.pad(wk, ((0, BWp - BW), (0, NCp - NC))).astype(jnp.bfloat16)
    bkp = jnp.pad(bk.reshape(1, NC), ((0, 0), (0, NCp - NC))).astype(jnp.float32)

    # TODO(synk): at real ResNet-152 scale (F=2048, big H*W), tile the conv GEMM
    # over spatial blocks with BlockSpec pipelining and set vmem_limit_bytes
    # (v7x has only 64 MiB VMEM); at these toy shapes everything fits per block.
    out = pl.pallas_call(
        transfer_model_kernel,
        out_shape=jax.ShapeDtypeStruct((B, NCp), jnp.float32),
        grid=(n_blk,),
        in_specs=[
            pl.BlockSpec((block_b * HW, K), lambda b: (b, 0)),     # patches block
            pl.BlockSpec((K, Fp),           lambda b: (0, 0)),     # folded conv wt
            pl.BlockSpec((block_b, block_b * HW), lambda b: (0, 0)),  # pooling matrix
            pl.BlockSpec((Fp, BWp),         lambda b: (0, 0)),     # bottleneck weight
            pl.BlockSpec((1, BWp),          lambda b: (0, 0)),     # bottleneck bias
            pl.BlockSpec((BWp, NCp),        lambda b: (0, 0)),     # classifier weight
            pl.BlockSpec((1, NCp),          lambda b: (0, 0)),     # classifier bias
        ],
        out_specs=pl.BlockSpec((block_b, NCp), lambda b: (b, 0)),
        compiler_params=pltpu.CompilerParams(
            dimension_semantics=("parallel",)),                    # both TCs on v7x
    )(patches, wcf, pool, wbp, bbp, wkp, bkp)

    return out[:, :NC]


def reference(x_nchw, params):
    """Plain-JAX f32 reference for correctness check."""
    wc, bc, wb, bb, wk, bk = params
    x = jnp.transpose(x_nchw, (0, 2, 3, 1)).astype(jnp.float32)
    x = jnp.pad(x, ((0, 0), (1, 1), (1, 1), (0, 0)))
    B, Hp, Wp, C = x.shape
    H, W = Hp - 2, Wp - 2
    F = wc.shape[-1]
    acc = jnp.zeros((B, H, W, F), jnp.float32)
    for dh in range(3):
        for dw in range(3):
            acc = acc + jnp.einsum('bhwc,cf->bhwf',
                                   x[:, dh:dh + H, dw:dw + W, :], wc[dh, dw])
    acc = jnp.maximum(acc + bc[None], 0.0)
    feats = jnp.mean(acc, axis=(1, 2))
    h = jnp.maximum(feats @ wb + bb, 0.0)
    return h @ wk + bk


if __name__ == "__main__":
    # Small shapes consistent with the module's forward (NCHW input like PyTorch):
    B, C, H, W = 2, 4, 16, 16
    F = 32                             # base_network.output_num() (surrogate)
    BW = 64                            # bottleneck_width
    NC = 8                             # num_class

    key = jax.random.PRNGKey(0)
    k = jax.random.split(key, 7)
    x = jax.random.normal(k[0], (B, C, H, W), jnp.float32)

    wc = jax.random.normal(k[1], (3, 3, C, F), jnp.float32) * 0.1   # conv weight
    bc = jax.random.normal(k[2], (1, F), jnp.float32) * 0.01        # conv bias
    wb = jax.random.normal(k[3], (F, BW), jnp.float32) * 0.1        # bottleneck Linear
    bb = jax.random.normal(k[4], (1, BW), jnp.float32) * 0.01
    wk = jax.random.normal(k[5], (BW, NC), jnp.float32) * 0.1       # classifier Linear
    bk = jax.random.normal(k[6], (1, NC), jnp.float32) * 0.01
    params = (wc, bc, wb, bb, wk, bk)

    out = jax.block_until_ready(transfer_model(x, params))
    ref = reference(x, params)

    assert out.shape == (B, NC)
    # Tolerance loosened vs f32 reference because MXU operands are bf16.
    assert jnp.allclose(out, ref, atol=2e-2, rtol=2e-2), "mismatch vs f32 reference"

    print("KERNEL_OK")
</pallas_src>

<mosaic_0001>
module attributes {stable_mosaic.version = 11 : i64} {
  func.func @transfer_model_kernel(%arg0: i32, %arg1: memref<512x37xbf16, #tpu.memory_space<vmem>>, %arg2: memref<37x128xbf16, #tpu.memory_space<vmem>>, %arg3: memref<2x512xbf16, #tpu.memory_space<vmem>>, %arg4: memref<128x128xbf16, #tpu.memory_space<vmem>>, %arg5: memref<1x128xf32, #tpu.memory_space<vmem>>, %arg6: memref<128x128xbf16, #tpu.memory_space<vmem>>, %arg7: memref<1x128xf32, #tpu.memory_space<vmem>>, %arg8: memref<2x128xf32, #tpu.memory_space<vmem>>) attributes {dimension_semantics = [#tpu.dimension_semantics<parallel>], iteration_bounds = array<i64: 1>, scalar_prefetch = 0 : i64, scratch_operands = 0 : i64, tpu.core_type = #tpu.core_type<tc>, window_params = [{transform_indices = @transform_0, window_bounds = array<i64: 512, 37>}, {pipeline_mode = #tpu.pipeline_mode<synchronous>, transform_indices = @transform_1, window_bounds = array<i64: 37, 128>}, {pipeline_mode = #tpu.pipeline_mode<synchronous>, transform_indices = @transform_2, window_bounds = array<i64: 2, 512>}, {pipeline_mode = #tpu.pipeline_mode<synchronous>, transform_indices = @transform_3, window_bounds = array<i64: 128, 128>}, {pipeline_mode = #tpu.pipeline_mode<synchronous>, transform_indices = @transform_4, window_bounds = array<i64: 1, 128>}, {pipeline_mode = #tpu.pipeline_mode<synchronous>, transform_indices = @transform_5, window_bounds = array<i64: 128, 128>}, {pipeline_mode = #tpu.pipeline_mode<synchronous>, transform_indices = @transform_6, window_bounds = array<i64: 1, 128>}, {transform_indices = @transform_7, window_bounds = array<i64: 2, 128>}]} {
    %c0 = arith.constant 0 : index
    %c0_0 = arith.constant 0 : index
    %0 = vector.load %arg1[%c0, %c0_0] : memref<512x37xbf16, #tpu.memory_space<vmem>>, vector<512x37xbf16>
    %c0_1 = arith.constant 0 : index
    %c0_2 = arith.constant 0 : index
    %1 = vector.load %arg2[%c0_1, %c0_2] : memref<37x128xbf16, #tpu.memory_space<vmem>>, vector<37x128xbf16>
    %cst = arith.constant dense<0.000000e+00> : vector<512x128xf32>
    %2 = tpu.matmul %0, %1, %cst {dimension_numbers = #tpu.dot_dimension_numbers<[1], [0], [0], [1], [0, 0, 1, 1], [], []>} : vector<512x37xbf16>, vector<37x128xbf16>, vector<512x128xf32> -> vector<512x128xf32>
    %cst_3 = arith.constant 0.000000e+00 : f32
    %3 = vector.broadcast %cst_3 : f32 to vector<512x128xf32>
    %4 = arith.maximumf %2, %3 : vector<512x128xf32>
    %c0_4 = arith.constant 0 : index
    %c0_5 = arith.constant 0 : index
    %5 = vector.load %arg3[%c0_4, %c0_5] : memref<2x512xbf16, #tpu.memory_space<vmem>>, vector<2x512xbf16>
    %6 = arith.truncf %4 : vector<512x128xf32> to vector<512x128xbf16>
    %cst_6 = arith.constant dense<0.000000e+00> : vector<2x128xf32>
    %7 = tpu.matmul %5, %6, %cst_6 {dimension_numbers = #tpu.dot_dimension_numbers<[1], [0], [0], [1], [0, 0, 1, 1], [], []>} : vector<2x512xbf16>, vector<512x128xbf16>, vector<2x128xf32> -> vector<2x128xf32>
    %8 = arith.truncf %7 : vector<2x128xf32> to vector<2x128xbf16>
    %c0_7 = arith.constant 0 : index
    %c0_8 = arith.constant 0 : index
    %9 = vector.load %arg4[%c0_7, %c0_8] : memref<128x128xbf16, #tpu.memory_space<vmem>>, vector<128x128xbf16>
    %cst_9 = arith.constant dense<0.000000e+00> : vector<2x128xf32>
    %10 = tpu.matmul %8, %9, %cst_9 {dimension_numbers = #tpu.dot_dimension_numbers<[1], [0], [0], [1], [0, 0, 1, 1], [], []>} : vector<2x128xbf16>, vector<128x128xbf16>, vector<2x128xf32> -> vector<2x128xf32>
    %c0_10 = arith.constant 0 : index
    %c0_11 = arith.constant 0 : index
    %11 = vector.load %arg5[%c0_10, %c0_11] : memref<1x128xf32, #tpu.memory_space<vmem>>, vector<1x128xf32>
    %12 = vector.broadcast %11 : vector<1x128xf32> to vector<2x128xf32>
    %13 = arith.addf %10, %12 : vector<2x128xf32>
    %cst_12 = arith.constant 0.000000e+00 : f32
    %14 = vector.broadcast %cst_12 : f32 to vector<2x128xf32>
    %15 = arith.maximumf %13, %14 : vector<2x128xf32>
    %16 = arith.truncf %15 : vector<2x128xf32> to vector<2x128xbf16>
    %c0_13 = arith.constant 0 : index
    %c0_14 = arith.constant 0 : index
    %17 = vector.load %arg6[%c0_13, %c0_14] : memref<128x128xbf16, #tpu.memory_space<vmem>>, vector<128x128xbf16>
    %cst_15 = arith.constant dense<0.000000e+00> : vector<2x128xf32>
    %18 = tpu.matmul %16, %17, %cst_15 {dimension_numbers = #tpu.dot_dimension_numbers<[1], [0], [0], [1], [0, 0, 1, 1], [], []>} : vector<2x128xbf16>, vector<128x128xbf16>, vector<2x128xf32> -> vector<2x128xf32>
    %c0_16 = arith.constant 0 : index
    %c0_17 = arith.constant 0 : index
    %19 = vector.load %arg7[%c0_16, %c0_17] : memref<1x128xf32, #tpu.memory_space<vmem>>, vector<1x128xf32>
    %20 = vector.broadcast %19 : vector<1x128xf32> to vector<2x128xf32>
    %21 = arith.addf %18, %20 : vector<2x128xf32>
    %c0_18 = arith.constant 0 : index
    %c0_19 = arith.constant 0 : index
    %22 = vector.load %arg8[%c0_18, %c0_19] : memref<2x128xf32, #tpu.memory_space<vmem>>, vector<2x128xf32>
    tpu.vector_store %arg8[%c0_18, %c0_19], %21 {strides = array<i32>} : memref<2x128xf32, #tpu.memory_space<vmem>>, vector<2x128xf32>,
    return
  }
  func.func @transform_0(%arg0: i32) -> (i32, i32) {
    %c0_i32 = arith.constant 0 : i32
    %c0_i32_0 = arith.constant 0 : i32
    return %arg0, %c0_i32 : i32, i32
  }
  func.func @transform_1(%arg0: i32) -> (i32, i32) {
    %c0_i32 = arith.constant 0 : i32
    %c0_i32_0 = arith.constant 0 : i32
    %c0_i32_1 = arith.constant 0 : i32
    return %c0_i32, %c0_i32_0 : i32, i32
  }
  func.func @transform_2(%arg0: i32) -> (i32, i32) {
    %c0_i32 = arith.constant 0 : i32
    %c0_i32_0 = arith.constant 0 : i32
    %c0_i32_1 = arith.constant 0 : i32
    return %c0_i32, %c0_i32_0 : i32, i32
  }
  func.func @transform_3(%arg0: i32) -> (i32, i32) {
    %c0_i32 = arith.constant 0 : i32
    %c0_i32_0 = arith.constant 0 : i32
    %c0_i32_1 = arith.constant 0 : i32
    return %c0_i32, %c0_i32_0 : i32, i32
  }
  func.func @transform_4(%arg0: i32) -> (i32, i32) {
    %c0_i32 = arith.constant 0 : i32
    %c0_i32_0 = arith.constant 0 : i32
    %c0_i32_1 = arith.constant 0 : i32
    return %c0_i32, %c0_i32_0 : i32, i32
  }
  func.func @transform_5(%arg0: i32) -> (i32, i32) {
    %c0_i32 = arith.constant 0 : i32
    %c0_i32_0 = arith.constant 0 : i32
    %c0_i32_1 = arith.constant 0 : i32
    return %c0_i32, %c0_i32_0 : i32, i32
  }
  func.func @transform_6(%arg0: i32) -> (i32, i32) {
    %c0_i32 = arith.constant 0 : i32
    %c0_i32_0 = arith.constant 0 : i32
    %c0_i32_1 = arith.constant 0 : i32
    return %c0_i32, %c0_i32_0 : i32, i32
  }
  func.func @transform_7(%arg0: i32) -> (i32, i32) {
    %c0_i32 = arith.constant 0 : i32
    %c0_i32_0 = arith.constant 0 : i32
    return %arg0, %c0_i32 : i32, i32
  }
}

</mosaic_0001>

<llo_original>
// kernel: tpu_custom_call.1
$region0: #{tpu_custom_call.1}
  #allocation0 [shape = 'u32[]', space=smem, size = 0x4, offset = 0x4, fixed_abs, tag = 'smem constant byte address 0x4 - core index']
  #allocation1 [shape = 'u32[144,128]{1,0:T(1,128)}', space=vmem, size = 0x12000, scoped, tag = 'internal scratch']
  %s0 = inlined_call_operand.vmem [shape: bf16[512,37], index: 0, kind: input, shape index: {}]
  %s1 = inlined_call_operand.vmem [shape: bf16[37,128], index: 1, kind: input, shape index: {}]
  %s2 = inlined_call_operand.vmem [shape: bf16[2,512], index: 2, kind: input, shape index: {}]
  %s3 = inlined_call_operand.vmem [shape: bf16[128,128], index: 3, kind: input, shape index: {}]
  %s4 = inlined_call_operand.vmem [shape: f32[1,128], index: 4, kind: input, shape index: {}]
  %s5 = inlined_call_operand.vmem [shape: bf16[128,128], index: 5, kind: input, shape index: {}]
  %s6 = inlined_call_operand.vmem [shape: f32[1,128], index: 6, kind: input, shape index: {}]
  %s7 = inlined_call_operand.hbm [shape: f32[2,128], index: 7, kind: output, shape index: {}]
  %s8 = sld [smem:[#allocation0]]
  $region38: #{tpu_custom_call.1} parent=0
    _
  %s10 = ssub.s32 1, %s8
  %s11 = scalar_select 0, %s10, %s8
  $region1: #{tpu_custom_call.1} parent=0
    #allocation2 [shape = 'u8[1024]{0}', space=vmem, size = 0x400, scoped, tag = 'output window, operand 0, single buffered']
    #allocation3 [shape = 's32[1]{0}', space=sflag, size = 0x4, scoped, tag = 'scoped memory for tpu_custom_call.1']
    %12 = vsyncpa [#allocation3], 0
    // Predicated region
    $region2: #{tpu_custom_call.1} parent=1 // pred_check
      _
    $region3: #{tpu_custom_call.1} parent=1 // pred_check_branch
      %14 = sbr.rel (0) target = $region5
    $region4: #{tpu_custom_call.1} parent=1 // pred_region
      _
    $region5: #{tpu_custom_call.1} parent=1 // pred_fallthru
      _
    // Predicated region
    $region6: #{tpu_custom_call.1} parent=1 // pred_check
      _
    $region7: #{tpu_custom_call.1} parent=1 // pred_check_branch
      %16 = sbr.rel (0) target = $region9
    $region8: #{tpu_custom_call.1} parent=1 // pred_region
      _
    $region9: #{tpu_custom_call.1} parent=1 // pred_fallthru
      _
    // Predicated region
    $region10: #{tpu_custom_call.1} parent=1 // pred_check
      _
    $region11: #{tpu_custom_call.1} parent=1 // pred_check_branch
      %18 = sbr.rel (0) target = $region13
    $region12: #{tpu_custom_call.1} parent=1 // pred_region
      _
    $region13: #{tpu_custom_call.1} parent=1 // pred_fallthru
      _
    // Predicated region
    $region14: #{tpu_custom_call.1} parent=1 // pred_check
      _
    $region15: #{tpu_custom_call.1} parent=1 // pred_check_branch
      %20 = sbr.rel (0) target = $region17
    $region16: #{tpu_custom_call.1} parent=1 // pred_region
      _
    $region17: #{tpu_custom_call.1} parent=1 // pred_fallthru
      _
    // Predicated region
    $region18: #{tpu_custom_call.1} parent=1 // pred_check
      _
    $region19: #{tpu_custom_call.1} parent=1 // pred_check_branch
      %22 = sbr.rel (0) target = $region21
    $region20: #{tpu_custom_call.1} parent=1 // pred_region
      _
    $region21: #{tpu_custom_call.1} parent=1 // pred_fallthru
      _
    // Predicated region
    $region22: #{tpu_custom_call.1} parent=1 // pred_check
      _
    $region23: #{tpu_custom_call.1} parent=1 // pred_check_branch
      %24 = sbr.rel (0) target = $region25
    $region24: #{tpu_custom_call.1} parent=1 // pred_region
      _
    $region25: #{tpu_custom_call.1} parent=1 // pred_fallthru
      _
    // Predicated region
    $region26: #{tpu_custom_call.1} parent=1 // pred_check
      _
    $region27: #{tpu_custom_call.1} parent=1 // pred_check_branch
      %26 = sbr.rel (0) target = $region29
    $region28: #{tpu_custom_call.1} parent=1 // pred_region
      _
    $region29: #{tpu_custom_call.1} parent=1 // pred_fallthru
      _
    %v28 = vld [vmem:[%s0] sm:$0xf]
    %v29 = vld [vmem:[%s0 + $0x4] sm:$0xf]
    %v30 = vld [vmem:[%s0 + $0x8] sm:$0xf]
    %v31 = vld [vmem:[%s0 + $0xc] sm:$0xf]
    %v32 = vld [vmem:[%s0 + $0x10] sm:$0xf]
    %v33 = vld [vmem:[%s0 + $0x14] sm:$0xf]
    %v34 = vld [vmem:[%s0 + $0x18] sm:$0xf]
    %v35 = vld [vmem:[%s0 + $0x1c] sm:$0xf]
    %v36 = vld [vmem:[%s0 + $0x20] sm:$0xf]
    %v37 = vld [vmem:[%s0 + $0x24] sm:$0xf]
    %v38 = vld [vmem:[%s0 + $0x28] sm:$0xf]
    %v39 = vld [vmem:[%s0 + $0x2c] sm:$0xf]
    %v40 = vld [vmem:[%s0 + $0x30] sm:$0xf]
    %v41 = vld [vmem:[%s0 + $0x34] sm:$0xf]
    %v42 = vld [vmem:[%s0 + $0x38] sm:$0xf]
    %v43 = vld [vmem:[%s0 + $0x3c] sm:$0xf]
    %v44 = vld [vmem:[%s0 + $0x40] sm:$0xf]
    %v45 = vld [vmem:[%s0 + $0x44] sm:$0xf]
    %v46 = vld [vmem:[%s0 + $0x48] sm:$0xf]
    %v47 = vld [vmem:[%s0 + $0x4c] sm:$0xf]
    %v48 = vld [vmem:[%s0 + $0x50] sm:$0xf]
    %v49 = vld [vmem:[%s0 + $0x54] sm:$0xf]
    %v50 = vld [vmem:[%s0 + $0x58] sm:$0xf]
    %v51 = vld [vmem:[%s0 + $0x5c] sm:$0xf]
    %v52 = vld [vmem:[%s0 + $0x60] sm:$0xf]
    %v53 = vld [vmem:[%s0 + $0x64] sm:$0xf]
    %v54 = vld [vmem:[%s0 + $0x68] sm:$0xf]
    %v55 = vld [vmem:[%s0 + $0x6c] sm:$0xf]
    %v56 = vld [vmem:[%s0 + $0x70] sm:$0xf]
    %v57 = vld [vmem:[%s0 + $0x74] sm:$0xf]
    %v58 = vld [vmem:[%s0 + $0x78] sm:$0xf]
    %v59 = vld [vmem:[%s0 + $0x7c] sm:$0xf]
    %v60 = vld [vmem:[%s0 + $0x80] sm:$0xf]
    %v61 = vld [vmem:[%s0 + $0x84] sm:$0xf]
    %v62 = vld [vmem:[%s0 + $0x88] sm:$0xf]
    %v63 = vld [vmem:[%s0 + $0x8c] sm:$0xf]
    %v64 = vld [vmem:[%s0 + $0x90] sm:$0xf]
    %v65 = vld [vmem:[%s0 + $0x94] sm:$0xf]
    %v66 = vld [vmem:[%s0 + $0x98] sm:$0xf]
    %v67 = vld [vmem:[%s0 + $0x9c] sm:$0xf]
    %v68 = vld [vmem:[%s0 + $0xa0] sm:$0xf]
    %v69 = vld [vmem:[%s0 + $0xa4] sm:$0xf]
    %v70 = vld [vmem:[%s0 + $0xa8] sm:$0xf]
    %v71 = vld [vmem:[%s0 + $0xac] sm:$0xf]
    %v72 = vld [vmem:[%s0 + $0xb0] sm:$0xf]
    %v73 = vld [vmem:[%s0 + $0xb4] sm:$0xf]
    %v74 = vld [vmem:[%s0 + $0xb8] sm:$0xf]
    %v75 = vld [vmem:[%s0 + $0xbc] sm:$0xf]
    %v76 = vld [vmem:[%s0 + $0xc0] sm:$0xf]
    %v77 = vld [vmem:[%s0 + $0xc4] sm:$0xf]
    %v78 = vld [vmem:[%s0 + $0xc8] sm:$0xf]
    %v79 = vld [vmem:[%s0 + $0xcc] sm:$0xf]
    %v80 = vld [vmem:[%s0 + $0xd0] sm:$0xf]
    %v81 = vld [vmem:[%s0 + $0xd4] sm:$0xf]
    %v82 = vld [vmem:[%s0 + $0xd8] sm:$0xf]
    %v83 = vld [vmem:[%s0 + $0xdc] sm:$0xf]
    %v84 = vld [vmem:[%s0 + $0xe0] sm:$0xf]
    %v85 = vld [vmem:[%s0 + $0xe4] sm:$0xf]
    %v86 = vld [vmem:[%s0 + $0xe8] sm:$0xf]
    %v87 = vld [vmem:[%s0 + $0xec] sm:$0xf]
    %v88 = vld [vmem:[%s0 + $0xf0] sm:$0xf]
    %v89 = vld [vmem:[%s0 + $0xf4] sm:$0xf]
    %v90 = vld [vmem:[%s0 + $0xf8] sm:$0xf]
    %v91 = vld [vmem:[%s0 + $0xfc] sm:$0xf]
    %v92 = vld [vmem:[%s1] sm:$0xf]
    %v93 = vld [vmem:[%s1 + $0x4] sm:$0xf]
    %v94 = vld [vmem:[%s1 + $0x8] sm:$0xf]
    %v95 = vld [vmem:[%s1 + $0xc] sm:$0xf]
    %v96 = vld [vmem:[%s1 + $0x10] sm:$0x7]
    %v161 = vunpack.c.l.b16 %v28
    %v162 = vunpack.c.l.b16 %v29
    %v163 = vunpack.c.l.b16 %v30
    %v164 = vunpack.c.l.b16 %v31
    %v165 = vunpack.c.l.b16 %v32
    %v166 = vunpack.c.l.b16 %v33
    %v167 = vunpack.c.l.b16 %v34
    %v168 = vunpack.c.l.b16 %v35
    %v169 = vunpack.c.l.b16 %v36
    %v170 = vunpack.c.l.b16 %v37
    %v171 = vunpack.c.l.b16 %v38
    %v172 = vunpack.c.l.b16 %v39
    %v173 = vunpack.c.l.b16 %v40
    %v174 = vunpack.c.l.b16 %v41
    %v175 = vunpack.c.l.b16 %v42
    %v176 = vunpack.c.l.b16 %v43
    %v177 = vunpack.c.l.b16 %v44
    %v178 = vunpack.c.l.b16 %v45
    %v179 = vunpack.c.l.b16 %v46
    %v180 = vunpack.c.l.b16 %v47
    %v181 = vunpack.c.l.b16 %v48
    %v182 = vunpack.c.l.b16 %v49
    %v183 = vunpack.c.l.b16 %v50
    %v184 = vunpack.c.l.b16 %v51
    %v185 = vunpack.c.l.b16 %v52
    %v186 = vunpack.c.l.b16 %v53
    %v187 = vunpack.c.l.b16 %v54
    %v188 = vunpack.c.l.b16 %v55
    %v189 = vunpack.c.l.b16 %v56
    %v190 = vunpack.c.l.b16 %v57
    %v191 = vunpack.c.l.b16 %v58
    %v192 = vunpack.c.l.b16 %v59
    %v193 = vunpack.c.l.b16 %v60
    %v194 = vunpack.c.l.b16 %v61
    %v195 = vunpack.c.l.b16 %v62
    %v196 = vunpack.c.l.b16 %v63
    %v197 = vunpack.c.l.b16 %v64
    %v198 = vunpack.c.l.b16 %v65
    %v199 = vunpack.c.l.b16 %v66
    %v200 = vunpack.c.l.b16 %v67
    %v201 = vunpack.c.l.b16 %v68
    %v202 = vunpack.c.l.b16 %v69
    %v203 = vunpack.c.l.b16 %v70
    %v204 = vunpack.c.l.b16 %v71
    %v205 = vunpack.c.l.b16 %v72
    %v206 = vunpack.c.l.b16 %v73
    %v207 = vunpack.c.l.b16 %v74
    %v208 = vunpack.c.l.b16 %v75
    %v209 = vunpack.c.l.b16 %v76
    %v210 = vunpack.c.l.b16 %v77
    %v211 = vunpack.c.l.b16 %v78
    %v212 = vunpack.c.l.b16 %v79
    %v213 = vunpack.c.l.b16 %v80
    %v214 = vunpack.c.l.b16 %v81
    %v215 = vunpack.c.l.b16 %v82
    %v216 = vunpack.c.l.b16 %v83
    %v217 = vunpack.c.l.b16 %v84
    %v218 = vunpack.c.l.b16 %v85
    %v219 = vunpack.c.l.b16 %v86
    %v220 = vunpack.c.l.b16 %v87
    %v221 = vunpack.c.l.b16 %v88
    %v222 = vunpack.c.l.b16 %v89
    %v223 = vunpack.c.l.b16 %v90
    %v224 = vunpack.c.l.b16 %v91
    %v225 = vpack.c.b16 %v162, %v161
    %v226 = vpack.c.b16 %v164, %v163
    %v227 = vpack.c.b16 %v166, %v165
    %v228 = vpack.c.b16 %v168, %v167
    %v229 = vpack.c.b16 %v170, %v169
    %v230 = vpack.c.b16 %v172, %v171
    %v231 = vpack.c.b16 %v174, %v173
    %v232 = vpack.c.b16 %v176, %v175
    %v233 = vpack.c.b16 %v178, %v177
    %v234 = vpack.c.b16 %v180, %v179
    %v235 = vpack.c.b16 %v182, %v181
    %v236 = vpack.c.b16 %v184, %v183
    %v237 = vpack.c.b16 %v186, %v185
    %v238 = vpack.c.b16 %v188, %v187
    %v239 = vpack.c.b16 %v190, %v189
    %v240 = vpack.c.b16 %v192, %v191
    %v241 = vpack.c.b16 %v194, %v193
    %v242 = vpack.c.b16 %v196, %v195
    %v243 = vpack.c.b16 %v198, %v197
    %v244 = vpack.c.b16 %v200, %v199
    %v245 = vpack.c.b16 %v202, %v201
    %v246 = vpack.c.b16 %v204, %v203
    %v247 = vpack.c.b16 %v206, %v205
    %v248 = vpack.c.b16 %v208, %v207
    %v249 = vpack.c.b16 %v210, %v209
    %v250 = vpack.c.b16 %v212, %v211
    %v251 = vpack.c.b16 %v214, %v213
    %v252 = vpack.c.b16 %v216, %v215
    %v253 = vpack.c.b16 %v218, %v217
    %v254 = vpack.c.b16 %v220, %v219
    %v255 = vpack.c.b16 %v222, %v221
    %v256 = vpack.c.b16 %v224, %v223
    %v262 = vunpack.c.l.b16 %v92
    %v263 = vunpack.c.l.b16 %v93
    %v264 = vunpack.c.l.b16 %v94
    %v265 = vunpack.c.l.b16 %v95
    %v266 = vunpack.c.l.b16 %v96
    %v267 = vpack.c.b16 %v263, %v262
    %v268 = vpack.c.b16 %v265, %v264
    %v269 = vpack.c.b16 %v266, %v266
    %vm272 = vcmask 302080
    %v274 = vsel %vm272, %v225, 0
    %v277 = vsel %vm272, %v226, 0
    %v280 = vsel %vm272, %v227, 0
    %v283 = vsel %vm272, %v228, 0
    %v286 = vsel %vm272, %v229, 0
    %v289 = vsel %vm272, %v230, 0
    %v292 = vsel %vm272, %v231, 0
    %v295 = vsel %vm272, %v232, 0
    %v298 = vsel %vm272, %v233, 0
    %v301 = vsel %vm272, %v234, 0
    %v304 = vsel %vm272, %v235, 0
    %v307 = vsel %vm272, %v236, 0
    %v310 = vsel %vm272, %v237, 0
    %v313 = vsel %vm272, %v238, 0
    %v316 = vsel %vm272, %v239, 0
    %v319 = vsel %vm272, %v240, 0
    %v322 = vsel %vm272, %v241, 0
    %v325 = vsel %vm272, %v242, 0
    %v328 = vsel %vm272, %v243, 0
    %v331 = vsel %vm272, %v244, 0
    %v334 = vsel %vm272, %v245, 0
    %v337 = vsel %vm272, %v246, 0
    %v340 = vsel %vm272, %v247, 0
    %v343 = vsel %vm272, %v248, 0
    %v346 = vsel %vm272, %v249, 0
    %v349 = vsel %vm272, %v250, 0
    %v352 = vsel %vm272, %v251, 0
    %v355 = vsel %vm272, %v252, 0
    %v358 = vsel %vm272, %v253, 0
    %v361 = vsel %vm272, %v254, 0
    %v364 = vsel %vm272, %v255, 0
    %v367 = vsel %vm272, %v256, 0
    %vm369 = vcmask 1041408
    %vm370 = vcmask 1042432
    %v371 = vsel %vm369, 4294967295, 65535
    %v372 = vsel %vm370, %v371, 0
    %v374 = vand.u32 %v269, %v372
    %376 = vmatprep.subr.bf16.mxu0 0
    %377 = vmatpush1.bf16.msra.mxu0 %v267
    %378 = vmatprep.subr.bf16.mxu0 0
    %379 = vmatpush1.bf16.msra.mxu0 %v268
    %380 = vmatprep.subr.bf16.mxu0 0
    %381 = vmatpush1.bf16.msra.mxu0 %v374
    %382 = vmatprep.subr.bf16.mxu0 0
    %383 = vmatpush1.bf16.msra.mxu0 0
    %384 = vmatprep.subr.bf16.mxu0 0
    %385 = vmatpush1.bf16.msra.mxu0 0
    %386 = vmatprep.subr.bf16.mxu0 0
    %387 = vmatpush1.bf16.msra.mxu0 0
    %388 = vmatprep.subr.bf16.mxu0 0
    %389 = vmatpush1.bf16.msra.mxu0 0
    %390 = vmatprep.subr.bf16.mxu0 0
    %391 = vmatpush1.bf16.msra.mxu0 0
    %392 = vmatprep.subr.bf16.mxu0 0
    %393 = vmatpush1.bf16.msra.mxu0 0
    %394 = vmatprep.subr.bf16.mxu0 0
    %395 = vmatpush1.bf16.msra.mxu0 0
    %396 = vmatprep.subr.bf16.mxu0 0
    %397 = vmatpush1.bf16.msra.mxu0 0
    %398 = vmatprep.subr.bf16.mxu0 0
    %399 = vmatpush1.bf16.msra.mxu0 0
    %400 = vmatprep.subr.bf16.mxu0 0
    %401 = vmatpush1.bf16.msra.mxu0 0
    %402 = vmatprep.subr.bf16.mxu0 0
    %403 = vmatpush1.bf16.msra.mxu0 0
    %404 = vmatprep.subr.bf16.mxu0 0
    %405 = vmatpush1.bf16.msra.mxu0 0
    %406 = vmatprep.subr.bf16.mxu0 0
    %407 = vmatpush1.bf16.msra.mxu0 0
    %408 = vmatprep.mubr.bf16.mxu0 0
    %409 = vmatmul.mubr.bf16.gmra.mrb[0].mxu0 %v274
    %v410 = vpop.f32.mrb[0].mxu0
    %v411 = vadd.f32 0.0, %v410
    %v412 = vpop.f32.mrb[0].mxu0
    %v413 = vpop.f32.mrb[0].mxu0
    %v414 = vadd.f32 0.0, %v413
    %v415 = vpop.f32.mrb[0].mxu0
    %416 = vmatprep.mubr.bf16.mxu0 0
    %417 = vmatmul.mubr.bf16.gmra.mrb[0].mxu0 %v277
    %v418 = vpop.f32.mrb[0].mxu0
    %v419 = vadd.f32 0.0, %v418
    %v420 = vpop.f32.mrb[0].mxu0
    %v421 = vpop.f32.mrb[0].mxu0
    %v422 = vadd.f32 0.0, %v421
    %v423 = vpop.f32.mrb[0].mxu0
    %424 = vmatprep.mubr.bf16.mxu0 0
    %425 = vmatmul.mubr.bf16.gmra.mrb[0].mxu0 %v280
    %v426 = vpop.f32.mrb[0].mxu0
    %v427 = vadd.f32 0.0, %v426
    %v428 = vpop.f32.mrb[0].mxu0
    %v429 = vpop.f32.mrb[0].mxu0
    %v430 = vadd.f32 0.0, %v429
    %v431 = vpop.f32.mrb[0].mxu0
    %432 = vmatprep.mubr.bf16.mxu0 0
    %433 = vmatmul.mubr.bf16.gmra.mrb[0].mxu0 %v283
    %v434 = vpop.f32.mrb[0].mxu0
    %v435 = vadd.f32 0.0, %v434
    %v436 = vpop.f32.mrb[0].mxu0
    %v437 = vpop.f32.mrb[0].mxu0
    %v438 = vadd.f32 0.0, %v437
    %v439 = vpop.f32.mrb[0].mxu0
    %440 = vmatprep.mubr.bf16.mxu0 0
    %441 = vmatmul.mubr.bf16.gmra.mrb[0].mxu0 %v286
    %v442 = vpop.f32.mrb[0].mxu0
    %v443 = vadd.f32 0.0, %v442
    %v444 = vpop.f32.mrb[0].mxu0
    %v445 = vpop.f32.mrb[0].mxu0
    %v446 = vadd.f32 0.0, %v445
    %v447 = vpop.f32.mrb[0].mxu0
    %448 = vmatprep.mubr.bf16.mxu0 0
    %449 = vmatmul.mubr.bf16.gmra.mrb[0].mxu0 %v289
    %v450 = vpop.f32.mrb[0].mxu0
    %v451 = vadd.f32 0.0, %v450
    %v452 = vpop.f32.mrb[0].mxu0
    %v453 = vpop.f32.mrb[0].mxu0
    %v454 = vadd.f32 0.0, %v453
    %v455 = vpop.f32.mrb[0].mxu0
    %456 = vmatprep.mubr.bf16.mxu0 0
    %457 = vmatmul.mubr.bf16.gmra.mrb[0].mxu0 %v292
    %v458 = vpop.f32.mrb[0].mxu0
    %v459 = vadd.f32 0.0, %v458
    %v460 = vpop.f32.mrb[0].mxu0
    %v461 = vpop.f32.mrb[0].mxu0
    %v462 = vadd.f32 0.0, %v461
    %v463 = vpop.f32.mrb[0].mxu0
    %464 = vmatprep.mubr.bf16.mxu0 0
    %465 = vmatmul.mubr.bf16.gmra.mrb[0].mxu0 %v295
    %v466 = vpop.f32.mrb[0].mxu0
    %v467 = vadd.f32 0.0, %v466
    %v468 = vpop.f32.mrb[0].mxu0
    %v469 = vpop.f32.mrb[0].mxu0
    %v470 = vadd.f32 0.0, %v469
    %v471 = vpop.f32.mrb[0].mxu0
    %472 = vmatprep.mubr.bf16.mxu0 0
    %473 = vmatmul.mubr.bf16.gmra.mrb[0].mxu0 %v298
    %v474 = vpop.f32.mrb[0].mxu0
    %v475 = vadd.f32 0.0, %v474
    %v476 = vpop.f32.mrb[0].mxu0
    %v477 = vpop.f32.mrb[0].mxu0
    %v478 = vadd.f32 0.0, %v477
    %v479 = vpop.f32.mrb[0].mxu0
    %480 = vmatprep.mubr.bf16.mxu0 0
    %481 = vmatmul.mubr.bf16.gmra.mrb[0].mxu0 %v301
    %v482 = vpop.f32.mrb[0].mxu0
    %v483 = vadd.f32 0.0, %v482
    %v484 = vpop.f32.mrb[0].mxu0
    %v485 = vpop.f32.mrb[0].mxu0
    %v486 = vadd.f32 0.0, %v485
    %v487 = vpop.f32.mrb[0].mxu0
    %488 = vmatprep.mubr.bf16.mxu0 0
    %489 = vmatmul.mubr.bf16.gmra.mrb[0].mxu0 %v304
    %v490 = vpop.f32.mrb[0].mxu0
    %v491 = vadd.f32 0.0, %v490
    %v492 = vpop.f32.mrb[0].mxu0
    %v493 = vpop.f32.mrb[0].mxu0
    %v494 = vadd.f32 0.0, %v493
    %v495 = vpop.f32.mrb[0].mxu0
    %496 = vmatprep.mubr.bf16.mxu0 0
    %497 = vmatmul.mubr.bf16.gmra.mrb[0].mxu0 %v307
    %v498 = vpop.f32.mrb[0].mxu0
    %v499 = vadd.f32 0.0, %v498
    %v500 = vpop.f32.mrb[0].mxu0
    %v501 = vpop.f32.mrb[0].mxu0
    %v502 = vadd.f32 0.0, %v501
    %v503 = vpop.f32.mrb[0].mxu0
    %504 = vmatprep.mubr.bf16.mxu0 0
    %505 = vmatmul.mubr.bf16.gmra.mrb[0].mxu0 %v310
    %v506 = vpop.f32.mrb[0].mxu0
    %v507 = vadd.f32 0.0, %v506
    %v508 = vpop.f32.mrb[0].mxu0
    %v509 = vpop.f32.mrb[0].mxu0
    %v510 = vadd.f32 0.0, %v509
    %v511 = vpop.f32.mrb[0].mxu0
    %512 = vmatprep.mubr.bf16.mxu0 0
    %513 = vmatmul.mubr.bf16.gmra.mrb[0].mxu0 %v313
    %v514 = vpop.f32.mrb[0].mxu0
    %v515 = vadd.f32 0.0, %v514
    %v516 = vpop.f32.mrb[0].mxu0
    %v517 = vpop.f32.mrb[0].mxu0
    %v518 = vadd.f32 0.0, %v517
    %v519 = vpop.f32.mrb[0].mxu0
    %520 = vmatprep.mubr.bf16.mxu0 0
    %521 = vmatmul.mubr.bf16.gmra.mrb[0].mxu0 %v316
    %v522 = vpop.f32.mrb[0].mxu0
    %v523 = vadd.f32 0.0, %v522
    %v524 = vpop.f32.mrb[0].mxu0
    %v525 = vpop.f32.mrb[0].mxu0
    %v526 = vadd.f32 0.0, %v525
    %v527 = vpop.f32.mrb[0].mxu0
    %528 = vmatprep.mubr.bf16.mxu0 0
    %529 = vmatmul.mubr.bf16.gmra.mrb[0].mxu0 %v319
    %v530 = vpop.f32.mrb[0].mxu0
    %v531 = vadd.f32 0.0, %v530
    %v532 = vpop.f32.mrb[0].mxu0
    %v533 = vpop.f32.mrb[0].mxu0
    %v534 = vadd.f32 0.0, %v533
    %v535 = vpop.f32.mrb[0].mxu0
    %536 = vmatprep.mubr.bf16.mxu0 0
    %537 = vmatmul.mubr.bf16.gmra.mrb[0].mxu0 %v322
    %v538 = vpop.f32.mrb[0].mxu0
    %v539 = vadd.f32 0.0, %v538
    %v540 = vpop.f32.mrb[0].mxu0
    %v541 = vpop.f32.mrb[0].mxu0
    %v542 = vadd.f32 0.0, %v541
    %v543 = vpop.f32.mrb[0].mxu0
    %544 = vmatprep.mubr.bf16.mxu0 0
    %545 = vmatmul.mubr.bf16.gmra.mrb[0].mxu0 %v325
    %v546 = vpop.f32.mrb[0].mxu0
    %v547 = vadd.f32 0.0, %v546
    %v548 = vpop.f32.mrb[0].mxu0
    %v549 = vpop.f32.mrb[0].mxu0
    %v550 = vadd.f32 0.0, %v549
    %v551 = vpop.f32.mrb[0].mxu0
    %552 = vmatprep.mubr.bf16.mxu0 0
    %553 = vmatmul.mubr.bf16.gmra.mrb[0].mxu0 %v328
    %v554 = vpop.f32.mrb[0].mxu0
    %v555 = vadd.f32 0.0, %v554
    %v556 = vpop.f32.mrb[0].mxu0
    %v557 = vpop.f32.mrb[0].mxu0
    %v558 = vadd.f32 0.0, %v557
    %v559 = vpop.f32.mrb[0].mxu0
    %560 = vmatprep.mubr.bf16.mxu0 0
    %561 = vmatmul.mubr.bf16.gmra.mrb[0].mxu0 %v331
    %v562 = vpop.f32.mrb[0].mxu0
    %v563 = vadd.f32 0.0, %v562
    %v564 = vpop.f32.mrb[0].mxu0
    %v565 = vpop.f32.mrb[0].mxu0
    %v566 = vadd.f32 0.0, %v565
    %v567 = vpop.f32.mrb[0].mxu0
    %568 = vmatprep.mubr.bf16.mxu0 0
    %569 = vmatmul.mubr.bf16.gmra.mrb[0].mxu0 %v334
    %v570 = vpop.f32.mrb[0].mxu0
    %v571 = vadd.f32 0.0, %v570
    %v572 = vpop.f32.mrb[0].mxu0
    %v573 = vpop.f32.mrb[0].mxu0
    %v574 = vadd.f32 0.0, %v573
    %v575 = vpop.f32.mrb[0].mxu0
    %576 = vmatprep.mubr.bf16.mxu0 0
    %577 = vmatmul.mubr.bf16.gmra.mrb[0].mxu0 %v337
    %v578 = vpop.f32.mrb[0].mxu0
    %v579 = vadd.f32 0.0, %v578
    %v580 = vpop.f32.mrb[0].mxu0
    %v581 = vpop.f32.mrb[0].mxu0
    %v582 = vadd.f32 0.0, %v581
    %v583 = vpop.f32.mrb[0].mxu0
    %584 = vmatprep.mubr.bf16.mxu0 0
    %585 = vmatmul.mubr.bf16.gmra.mrb[0].mxu0 %v340
    %v586 = vpop.f32.mrb[0].mxu0
    %v587 = vadd.f32 0.0, %v586
    %v588 = vpop.f32.mrb[0].mxu0
    %v589 = vpop.f32.mrb[0].mxu0
    %v590 = vadd.f32 0.0, %v589
    %v591 = vpop.f32.mrb[0].mxu0
    %592 = vmatprep.mubr.bf16.mxu0 0
    %593 = vmatmul.mubr.bf16.gmra.mrb[0].mxu0 %v343
    %v594 = vpop.f32.mrb[0].mxu0
    %v595 = vadd.f32 0.0, %v594
    %v596 = vpop.f32.mrb[0].mxu0
    %v597 = vpop.f32.mrb[0].mxu0
    %v598 = vadd.f32 0.0, %v597
    %v599 = vpop.f32.mrb[0].mxu0
    %600 = vmatprep.mubr.bf16.mxu0 0
    %601 = vmatmul.mubr.bf16.gmra.mrb[0].mxu0 %v346
    %v602 = vpop.f32.mrb[0].mxu0
    %v603 = vadd.f32 0.0, %v602
    %v604 = vpop.f32.mrb[0].mxu0
    %v605 = vpop.f32.mrb[0].mxu0
    %v606 = vadd.f32 0.0, %v605
    %v607 = vpop.f32.mrb[0].mxu0
    %608 = vmatprep.mubr.bf16.mxu0 0
    %609 = vmatmul.mubr.bf16.gmra.mrb[0].mxu0 %v349
    %v610 = vpop.f32.mrb[0].mxu0
    %v611 = vadd.f32 0.0, %v610
    %v612 = vpop.f32.mrb[0].mxu0
    %v613 = vpop.f32.mrb[0].mxu0
    %v614 = vadd.f32 0.0, %v613
    %v615 = vpop.f32.mrb[0].mxu0
    %616 = vmatprep.mubr.bf16.mxu0 0
    %617 = vmatmul.mubr.bf16.gmra.mrb[0].mxu0 %v352
    %v618 = vpop.f32.mrb[0].mxu0
    %v619 = vadd.f32 0.0, %v618
    %v620 = vpop.f32.mrb[0].mxu0
    %v621 = vpop.f32.mrb[0].mxu0
    %v622 = vadd.f32 0.0, %v621
    %v623 = vpop.f32.mrb[0].mxu0
    %624 = vmatprep.mubr.bf16.mxu0 0
    %625 = vmatmul.mubr.bf16.gmra.mrb[0].mxu0 %v355
    %v626 = vpop.f32.mrb[0].mxu0
    %v627 = vadd.f32 0.0, %v626
    %v628 = vpop.f32.mrb[0].mxu0
    %v629 = vpop.f32.mrb[0].mxu0
    %v630 = vadd.f32 0.0, %v629
    %v631 = vpop.f32.mrb[0].mxu0
    %632 = vmatprep.mubr.bf16.mxu0 0
    %633 = vmatmul.mubr.bf16.gmra.mrb[0].mxu0 %v358
    %v634 = vpop.f32.mrb[0].mxu0
    %v635 = vadd.f32 0.0, %v634
    %v636 = vpop.f32.mrb[0].mxu0
    %v637 = vpop.f32.mrb[0].mxu0
    %v638 = vadd.f32 0.0, %v637
    %v639 = vpop.f32.mrb[0].mxu0
    %640 = vmatprep.mubr.bf16.mxu0 0
    %641 = vmatmul.mubr.bf16.gmra.mrb[0].mxu0 %v361
    %v642 = vpop.f32.mrb[0].mxu0
    %v643 = vadd.f32 0.0, %v642
    %v644 = vpop.f32.mrb[0].mxu0
    %v645 = vpop.f32.mrb[0].mxu0
    %v646 = vadd.f32 0.0, %v645
    %v647 = vpop.f32.mrb[0].mxu0
    %648 = vmatprep.mubr.bf16.mxu0 0
    %649 = vmatmul.mubr.bf16.gmra.mrb[0].mxu0 %v364
    %v650 = vpop.f32.mrb[0].mxu0
    %v651 = vadd.f32 0.0, %v650
    %v652 = vpop.f32.mrb[0].mxu0
    %v653 = vpop.f32.mrb[0].mxu0
    %v654 = vadd.f32 0.0, %v653
    %v655 = vpop.f32.mrb[0].mxu0
    %656 = vmatprep.mubr.bf16.mxu0 0
    %657 = vmatmul.mubr.bf16.gmra.mrb[0].mxu0 %v367
    %v658 = vpop.f32.mrb[0].mxu0
    %v659 = vadd.f32 0.0, %v658
    %v660 = vpop.f32.mrb[0].mxu0
    %v661 = vpop.f32.mrb[0].mxu0
    %v662 = vadd.f32 0.0, %v661
    %v663 = vpop.f32.mrb[0].mxu0
    %664 = vdwg.mxu0
    %v665 = vmax.f32 %v411, 0.0
    %v666 = vmax.f32 %v414, 0.0
    %v667 = vmax.f32 %v419, 0.0
    %v668 = vmax.f32 %v422, 0.0
    %v669 = vmax.f32 %v427, 0.0
    %v670 = vmax.f32 %v430, 0.0
    %v671 = vmax.f32 %v435, 0.0
    %v672 = vmax.f32 %v438, 0.0
    %v673 = vmax.f32 %v443, 0.0
    %v674 = vmax.f32 %v446, 0.0
    %v675 = vmax.f32 %v451, 0.0
    %v676 = vmax.f32 %v454, 0.0
    %v677 = vmax.f32 %v459, 0.0
    %v678 = vmax.f32 %v462, 0.0
    %v679 = vmax.f32 %v467, 0.0
    %v680 = vmax.f32 %v470, 0.0
    %v681 = vmax.f32 %v475, 0.0
    %v682 = vmax.f32 %v478, 0.0
    %v683 = vmax.f32 %v483, 0.0
    %v684 = vmax.f32 %v486, 0.0
    %v685 = vmax.f32 %v491, 0.0
    %v686 = vmax.f32 %v494, 0.0
    %v687 = vmax.f32 %v499, 0.0
    %v688 = vmax.f32 %v502, 0.0
    %v689 = vmax.f32 %v507, 0.0
    %v690 = vmax.f32 %v510, 0.0
    %v691 = vmax.f32 %v515, 0.0
    %v692 = vmax.f32 %v518, 0.0
    %v693 = vmax.f32 %v523, 0.0
    %v694 = vmax.f32 %v526, 0.0
    %v695 = vmax.f32 %v531, 0.0
    %v696 = vmax.f32 %v534, 0.0
    %v697 = vmax.f32 %v539, 0.0
    %v698 = vmax.f32 %v542, 0.0
    %v699 = vmax.f32 %v547, 0.0
    %v700 = vmax.f32 %v550, 0.0
    %v701 = vmax.f32 %v555, 0.0
    %v702 = vmax.f32 %v558, 0.0
    %v703 = vmax.f32 %v563, 0.0
    %v704 = vmax.f32 %v566, 0.0
    %v705 = vmax.f32 %v571, 0.0
    %v706 = vmax.f32 %v574, 0.0
    %v707 = vmax.f32 %v579, 0.0
    %v708 = vmax.f32 %v582, 0.0
    %v709 = vmax.f32 %v587, 0.0
    %v710 = vmax.f32 %v590, 0.0
    %v711 = vmax.f32 %v595, 0.0
    %v712 = vmax.f32 %v598, 0.0
    %v713 = vmax.f32 %v603, 0.0
    %v714 = vmax.f32 %v606, 0.0
    %v715 = vmax.f32 %v611, 0.0
    %v716 = vmax.f32 %v614, 0.0
    %v717 = vmax.f32 %v619, 0.0
    %v718 = vmax.f32 %v622, 0.0
    %v719 = vmax.f32 %v627, 0.0
    %v720 = vmax.f32 %v630, 0.0
    %v721 = vmax.f32 %v635, 0.0
    %v722 = vmax.f32 %v638, 0.0
    %v723 = vmax.f32 %v643, 0.0
    %v724 = vmax.f32 %v646, 0.0
    %v725 = vmax.f32 %v651, 0.0
    %v726 = vmax.f32 %v654, 0.0
    %v727 = vmax.f32 %v659, 0.0
    %v728 = vmax.f32 %v662, 0.0
    %v729 = vld [vmem:[%s2] sm:$0xf]
    %v730 = vpack.c.bf16 %v666, %v665
    %v731 = vpack.c.bf16 %v668, %v667
    %v732 = vpack.c.bf16 %v670, %v669
    %v733 = vpack.c.bf16 %v672, %v671
    %v734 = vpack.c.bf16 %v674, %v673
    %v735 = vpack.c.bf16 %v676, %v675
    %v736 = vpack.c.bf16 %v678, %v677
    %v737 = vpack.c.bf16 %v680, %v679
    %v738 = vpack.c.bf16 %v682, %v681
    %v739 = vpack.c.bf16 %v684, %v683
    %v740 = vpack.c.bf16 %v686, %v685
    %v741 = vpack.c.bf16 %v688, %v687
    %v742 = vpack.c.bf16 %v690, %v689
    %v743 = vpack.c.bf16 %v692, %v691
    %v744 = vpack.c.bf16 %v694, %v693
    %v745 = vpack.c.bf16 %v696, %v695
    %v746 = vpack.c.bf16 %v698, %v697
    %v747 = vpack.c.bf16 %v700, %v699
    %v748 = vpack.c.bf16 %v702, %v701
    %v749 = vpack.c.bf16 %v704, %v703
    %v750 = vpack.c.bf16 %v706, %v705
    %v751 = vpack.c.bf16 %v708, %v707
    %v752 = vpack.c.bf16 %v710, %v709
    %v753 = vpack.c.bf16 %v712, %v711
    %v754 = vpack.c.bf16 %v714, %v713
    %v755 = vpack.c.bf16 %v716, %v715
    %v756 = vpack.c.bf16 %v718, %v717
    %v757 = vpack.c.bf16 %v720, %v719
    %v758 = vpack.c.bf16 %v722, %v721
    %v759 = vpack.c.bf16 %v724, %v723
    %v760 = vpack.c.bf16 %v726, %v725
    %v761 = vpack.c.bf16 %v728, %v727
    %v764 = vunpack.c.l.s4 1966171168
    %v765 = vunpack.c.0.s8 %v764
    %v766 = vlaneseq
    %v767 = vshrl.u32 %v766, 7
    %v768 = vsub.s32 %v765, %v767
    %v769 = vrot.slane %v729, %v768
    %v770 = vcombine.high %v769, %v769
    %v772 = vunpack.c.l.s4 1966171168
    %v773 = vunpack.c.0.s8 %v772
    %v774 = vlaneseq
    %v775 = vshrl.u32 %v774, 7
    %v776 = vsub.s32 %v773, %v775
    %v777 = vrot.slane %v769, %v776
    %v779 = vunpack.c.l.s4 1966171168
    %v780 = vunpack.c.0.s8 %v779
    %v781 = vlaneseq
    %v782 = vshrl.u32 %v781, 7
    %v783 = vsub.s32 %v780, %v782
    %v784 = vrot.slane %v770, %v783
    %v785 = vcombine.high %v777, %v777
    %v786 = vcombine.high %v784, %v784
    %791 = vmatprep.subr.bf16.mxu0 0
    %792 = vmatpush1.bf16.msra.mxu0 %v730
    %793 = vmatprep.subr.bf16.mxu0 0
    %794 = vmatpush1.bf16.msra.mxu0 %v731
    %795 = vmatprep.subr.bf16.mxu0 0
    %796 = vmatpush1.bf16.msra.mxu0 %v732
    %797 = vmatprep.subr.bf16.mxu0 0
    %798 = vmatpush1.bf16.msra.mxu0 %v733
    %799 = vmatprep.subr.bf16.mxu0 0
    %800 = vmatpush1.bf16.msra.mxu0 %v734
    %801 = vmatprep.subr.bf16.mxu0 0
    %802 = vmatpush1.bf16.msra.mxu0 %v735
    %803 = vmatprep.subr.bf16.mxu0 0
    %804 = vmatpush1.bf16.msra.mxu0 %v736
    %805 = vmatprep.subr.bf16.mxu0 0
    %806 = vmatpush1.bf16.msra.mxu0 %v737
    %807 = vmatprep.subr.bf16.mxu0 0
    %808 = vmatpush1.bf16.msra.mxu0 %v738
    %809 = vmatprep.subr.bf16.mxu0 0
    %810 = vmatpush1.bf16.msra.mxu0 %v739
    %811 = vmatprep.subr.bf16.mxu0 0
    %812 = vmatpush1.bf16.msra.mxu0 %v740
    %813 = vmatprep.subr.bf16.mxu0 0
    %814 = vmatpush1.bf16.msra.mxu0 %v741
    %815 = vmatprep.subr.bf16.mxu0 0
    %816 = vmatpush1.bf16.msra.mxu0 %v742
    %817 = vmatprep.subr.bf16.mxu0 0
    %818 = vmatpush1.bf16.msra.mxu0 %v743
    %819 = vmatprep.subr.bf16.mxu0 0
    %820 = vmatpush1.bf16.msra.mxu0 %v744
    %821 = vmatprep.subr.bf16.mxu0 0
    %822 = vmatpush1.bf16.msra.mxu0 %v745
    %823 = vmatprep.mubr.bf16.mxu0 %v784
    %824 = vmatmul.mubr.bf16.gmra.mrb[0].mxu0 %v777
    %v825 = vpop.f32.mrb[0].mxu0
    %v826 = vadd.f32 0.0, %v825
    %v827 = vpop.f32.mrb[0].mxu0
    %v828 = vpop.f32.mrb[0].mxu0
    %v829 = vpop.f32.mrb[0].mxu0
    %830 = vdwg.mxu0
    %831 = vmatprep.subr.bf16.mxu0 0
    %832 = vmatpush1.bf16.msra.mxu0 %v746
    %833 = vmatprep.subr.bf16.mxu0 0
    %834 = vmatpush1.bf16.msra.mxu0 %v747
    %835 = vmatprep.subr.bf16.mxu0 0
    %836 = vmatpush1.bf16.msra.mxu0 %v748
    %837 = vmatprep.subr.bf16.mxu0 0
    %838 = vmatpush1.bf16.msra.mxu0 %v749
    %839 = vmatprep.subr.bf16.mxu0 0
    %840 = vmatpush1.bf16.msra.mxu0 %v750
    %841 = vmatprep.subr.bf16.mxu0 0
    %842 = vmatpush1.bf16.msra.mxu0 %v751
    %843 = vmatprep.subr.bf16.mxu0 0
    %844 = vmatpush1.bf16.msra.mxu0 %v752
    %845 = vmatprep.subr.bf16.mxu0 0
    %846 = vmatpush1.bf16.msra.mxu0 %v753
    %847 = vmatprep.subr.bf16.mxu0 0
    %848 = vmatpush1.bf16.msra.mxu0 %v754
    %849 = vmatprep.subr.bf16.mxu0 0
    %850 = vmatpush1.bf16.msra.mxu0 %v755
    %851 = vmatprep.subr.bf16.mxu0 0
    %852 = vmatpush1.bf16.msra.mxu0 %v756
    %853 = vmatprep.subr.bf16.mxu0 0
    %854 = vmatpush1.bf16.msra.mxu0 %v757
    %855 = vmatprep.subr.bf16.mxu0 0
    %856 = vmatpush1.bf16.msra.mxu0 %v758
    %857 = vmatprep.subr.bf16.mxu0 0
    %858 = vmatpush1.bf16.msra.mxu0 %v759
    %859 = vmatprep.subr.bf16.mxu0 0
    %860 = vmatpush1.bf16.msra.mxu0 %v760
    %861 = vmatprep.subr.bf16.mxu0 0
    %862 = vmatpush1.bf16.msra.mxu0 %v761
    %863 = vmatprep.mubr.bf16.mxu0 %v786
    %864 = vmatmul.mubr.bf16.gmra.mrb[0].mxu0 %v785
    %v865 = vpop.f32.mrb[0].mxu0
    %v866 = vadd.f32 %v826, %v865
    %v867 = vpop.f32.mrb[0].mxu0
    %v868 = vpop.f32.mrb[0].mxu0
    %v869 = vpop.f32.mrb[0].mxu0
    %870 = vdwg.mxu0
    %v871 = vpack.c.bf16 %v866, %v866
    %v872 = vld [vmem:[%s3] sm:$0xf]
    %v873 = vld [vmem:[%s3 + $0x4] sm:$0xf]
    %v874 = vld [vmem:[%s3 + $0x8] sm:$0xf]
    %v875 = vld [vmem:[%s3 + $0xc] sm:$0xf]
    %v876 = vld [vmem:[%s3 + $0x10] sm:$0xf]
    %v877 = vld [vmem:[%s3 + $0x14] sm:$0xf]
    %v878 = vld [vmem:[%s3 + $0x18] sm:$0xf]
    %v879 = vld [vmem:[%s3 + $0x1c] sm:$0xf]
    %v880 = vld [vmem:[%s3 + $0x20] sm:$0xf]
    %v881 = vld [vmem:[%s3 + $0x24] sm:$0xf]
    %v882 = vld [vmem:[%s3 + $0x28] sm:$0xf]
    %v883 = vld [vmem:[%s3 + $0x2c] sm:$0xf]
    %v884 = vld [vmem:[%s3 + $0x30] sm:$0xf]
    %v885 = vld [vmem:[%s3 + $0x34] sm:$0xf]
    %v886 = vld [vmem:[%s3 + $0x38] sm:$0xf]
    %v887 = vld [vmem:[%s3 + $0x3c] sm:$0xf]
    %v888 = vld [vmem:[%s4] sm:$0x1]
    %v890 = vlaneseq
    %v891 = vshrl.u32 %v890, 7
    %v892 = vsub.s32 0, %v891
    %v893 = vrot.slane %v888, %v892
    %v911 = vunpack.c.l.b16 %v872
    %v912 = vunpack.c.l.b16 %v873
    %v913 = vunpack.c.l.b16 %v874
    %v914 = vunpack.c.l.b16 %v875
    %v915 = vunpack.c.l.b16 %v876
    %v916 = vunpack.c.l.b16 %v877
    %v917 = vunpack.c.l.b16 %v878
    %v918 = vunpack.c.l.b16 %v879
    %v919 = vunpack.c.l.b16 %v880
    %v920 = vunpack.c.l.b16 %v881
    %v921 = vunpack.c.l.b16 %v882
    %v922 = vunpack.c.l.b16 %v883
    %v923 = vunpack.c.l.b16 %v884
    %v924 = vunpack.c.l.b16 %v885
    %v925 = vunpack.c.l.b16 %v886
    %v926 = vunpack.c.l.b16 %v887
    %v927 = vpack.c.b16 %v912, %v911
    %v928 = vpack.c.b16 %v914, %v913
    %v929 = vpack.c.b16 %v916, %v915
    %v930 = vpack.c.b16 %v918, %v917
    %v931 = vpack.c.b16 %v920, %v919
    %v932 = vpack.c.b16 %v922, %v921
    %v933 = vpack.c.b16 %v924, %v923
    %v934 = vpack.c.b16 %v926, %v925
    %943 = vmatprep.subr.bf16.mxu0 0
    %944 = vmatpush1.bf16.msra.mxu0 %v927
    %945 = vmatprep.subr.bf16.mxu0 0
    %946 = vmatpush1.bf16.msra.mxu0 %v928
    %947 = vmatprep.subr.bf16.mxu0 0
    %948 = vmatpush1.bf16.msra.mxu0 %v929
    %949 = vmatprep.subr.bf16.mxu0 0
    %950 = vmatpush1.bf16.msra.mxu0 %v930
    %951 = vmatprep.subr.bf16.mxu0 0
    %952 = vmatpush1.bf16.msra.mxu0 %v931
    %953 = vmatprep.subr.bf16.mxu0 0
    %954 = vmatpush1.bf16.msra.mxu0 %v932
    %955 = vmatprep.subr.bf16.mxu0 0
    %956 = vmatpush1.bf16.msra.mxu0 %v933
    %957 = vmatprep.subr.bf16.mxu0 0
    %958 = vmatpush1.bf16.msra.mxu0 %v934
    %959 = vmatprep.subr.bf16.mxu0 0
    %960 = vmatpush1.bf16.msra.mxu0 0
    %961 = vmatprep.subr.bf16.mxu0 0
    %962 = vmatpush1.bf16.msra.mxu0 0
    %963 = vmatprep.subr.bf16.mxu0 0
    %964 = vmatpush1.bf16.msra.mxu0 0
    %965 = vmatprep.subr.bf16.mxu0 0
    %966 = vmatpush1.bf16.msra.mxu0 0
    %967 = vmatprep.subr.bf16.mxu0 0
    %968 = vmatpush1.bf16.msra.mxu0 0
    %969 = vmatprep.subr.bf16.mxu0 0
    %970 = vmatpush1.bf16.msra.mxu0 0
    %971 = vmatprep.subr.bf16.mxu0 0
    %972 = vmatpush1.bf16.msra.mxu0 0
    %973 = vmatprep.subr.bf16.mxu0 0
    %974 = vmatpush1.bf16.msra.mxu0 0
    %975 = vmatprep.mubr.bf16.mxu0 0
    %976 = vmatmul.mubr.bf16.gmra.mrb[0].mxu0 %v871
    %v977 = vpop.f32.mrb[0].mxu0
    %v978 = vadd.f32 %v893, %v977
    %v979 = vpop.f32.mrb[0].mxu0
    %v980 = vpop.f32.mrb[0].mxu0
    %v981 = vpop.f32.mrb[0].mxu0
    %982 = vdwg.mxu0
    %v983 = vmax.f32 %v978, 0.0
    %v984 = vpack.c.bf16 %v983, %v983
    %v985 = vld [vmem:[%s5] sm:$0xf]
    %v986 = vld [vmem:[%s5 + $0x4] sm:$0xf]
    %v987 = vld [vmem:[%s5 + $0x8] sm:$0xf]
    %v988 = vld [vmem:[%s5 + $0xc] sm:$0xf]
    %v989 = vld [vmem:[%s5 + $0x10] sm:$0xf]
    %v990 = vld [vmem:[%s5 + $0x14] sm:$0xf]
    %v991 = vld [vmem:[%s5 + $0x18] sm:$0xf]
    %v992 = vld [vmem:[%s5 + $0x1c] sm:$0xf]
    %v993 = vld [vmem:[%s5 + $0x20] sm:$0xf]
    %v994 = vld [vmem:[%s5 + $0x24] sm:$0xf]
    %v995 = vld [vmem:[%s5 + $0x28] sm:$0xf]
    %v996 = vld [vmem:[%s5 + $0x2c] sm:$0xf]
    %v997 = vld [vmem:[%s5 + $0x30] sm:$0xf]
    %v998 = vld [vmem:[%s5 + $0x34] sm:$0xf]
    %v999 = vld [vmem:[%s5 + $0x38] sm:$0xf]
    %v1000 = vld [vmem:[%s5 + $0x3c] sm:$0xf]
    %v1001 = vld [vmem:[%s6] sm:$0x1]
    %v1003 = vlaneseq
    %v1004 = vshrl.u32 %v1003, 7
    %v1005 = vsub.s32 0, %v1004
    %v1006 = vrot.slane %v1001, %v1005
    %v1024 = vunpack.c.l.b16 %v985
    %v1025 = vunpack.c.l.b16 %v986
    %v1026 = vunpack.c.l.b16 %v987
    %v1027 = vunpack.c.l.b16 %v988
    %v1028 = vunpack.c.l.b16 %v989
    %v1029 = vunpack.c.l.b16 %v990
    %v1030 = vunpack.c.l.b16 %v991
    %v1031 = vunpack.c.l.b16 %v992
    %v1032 = vunpack.c.l.b16 %v993
    %v1033 = vunpack.c.l.b16 %v994
    %v1034 = vunpack.c.l.b16 %v995
    %v1035 = vunpack.c.l.b16 %v996
    %v1036 = vunpack.c.l.b16 %v997
    %v1037 = vunpack.c.l.b16 %v998
    %v1038 = vunpack.c.l.b16 %v999
    %v1039 = vunpack.c.l.b16 %v1000
    %v1040 = vpack.c.b16 %v1025, %v1024
    %v1041 = vpack.c.b16 %v1027, %v1026
    %v1042 = vpack.c.b16 %v1029, %v1028
    %v1043 = vpack.c.b16 %v1031, %v1030
    %v1044 = vpack.c.b16 %v1033, %v1032
    %v1045 = vpack.c.b16 %v1035, %v1034
    %v1046 = vpack.c.b16 %v1037, %v1036
    %v1047 = vpack.c.b16 %v1039, %v1038
    %1056 = vmatprep.subr.bf16.mxu0 0
    %1057 = vmatpush1.bf16.msra.mxu0 %v1040
    %1058 = vmatprep.subr.bf16.mxu0 0
    %1059 = vmatpush1.bf16.msra.mxu0 %v1041
    %1060 = vmatprep.subr.bf16.mxu0 0
    %1061 = vmatpush1.bf16.msra.mxu0 %v1042
    %1062 = vmatprep.subr.bf16.mxu0 0
    %1063 = vmatpush1.bf16.msra.mxu0 %v1043
    %1064 = vmatprep.subr.bf16.mxu0 0
    %1065 = vmatpush1.bf16.msra.mxu0 %v1044
    %1066 = vmatprep.subr.bf16.mxu0 0
    %1067 = vmatpush1.bf16.msra.mxu0 %v1045
    %1068 = vmatprep.subr.bf16.mxu0 0
    %1069 = vmatpush1.bf16.msra.mxu0 %v1046
    %1070 = vmatprep.subr.bf16.mxu0 0
    %1071 = vmatpush1.bf16.msra.mxu0 %v1047
    %1072 = vmatprep.subr.bf16.mxu0 0
    %1073 = vmatpush1.bf16.msra.mxu0 0
    %1074 = vmatprep.subr.bf16.mxu0 0
    %1075 = vmatpush1.bf16.msra.mxu0 0
    %1076 = vmatprep.subr.bf16.mxu0 0
    %1077 = vmatpush1.bf16.msra.mxu0 0
    %1078 = vmatprep.subr.bf16.mxu0 0
    %1079 = vmatpush1.bf16.msra.mxu0 0
    %1080 = vmatprep.subr.bf16.mxu0 0
    %1081 = vmatpush1.bf16.msra.mxu0 0
    %1082 = vmatprep.subr.bf16.mxu0 0
    %1083 = vmatpush1.bf16.msra.mxu0 0
    %1084 = vmatprep.subr.bf16.mxu0 0
    %1085 = vmatpush1.bf16.msra.mxu0 0
    %1086 = vmatprep.subr.bf16.mxu0 0
    %1087 = vmatpush1.bf16.msra.mxu0 0
    %1088 = vmatprep.mubr.bf16.mxu0 0
    %1089 = vmatmul.mubr.bf16.gmra.mrb[0].mxu0 %v984
    %v1090 = vpop.f32.mrb[0].mxu0
    %v1091 = vadd.f32 %v1006, %v1090
    %v1092 = vpop.f32.mrb[0].mxu0
    %v1093 = vpop.f32.mrb[0].mxu0
    %v1094 = vpop.f32.mrb[0].mxu0
    %1095 = vdwg.mxu0
    %1096 = vst [vmem:[#allocation2] sm:$0x3] %v1091
    // Predicated region
    $region30: #{tpu_custom_call.1} parent=1 // pred_check
      _
    $region31: #{tpu_custom_call.1} parent=1 // pred_check_branch
      %1098 = sbr.rel (0) target = $region33
    $region32: #{tpu_custom_call.1} parent=1 // pred_region
      %s1100 = ssub.s32 32, 32
      %1101 = vsyncadd [#allocation3], %s1100
      %s1103 = sshll.u32 [#allocation2], 4
      %s1104 = int_to_ptr.vmem [resolvable:$true] %s1103
      %1106 = dma.vmem_to_hbm [thread:$0]  %s1104, 32, %s7, [#allocation3]
    $region33: #{tpu_custom_call.1} parent=1 // pred_fallthru
      _
    // Predicated region
    $region34: #{tpu_custom_call.1} parent=1 // pred_check
      _
    $region35: #{tpu_custom_call.1} parent=1 // pred_check_branch
      %1108 = sbr.rel (0) target = $region37
    $region36: #{tpu_custom_call.1} parent=1 // pred_region
      %1109 = dma.done [#allocation3], 32
    $region37: #{tpu_custom_call.1} parent=1 // pred_fallthru
      _
    %1110 = vsyncpa [#allocation3], 1

</llo_original>
